<compile_context>
chip_gen: v5e
topology: v5e:2x2
jax: 0.10.0
libtpu: 0.0.40
codegen_flags: <defaults>
</compile_context>

<pallas_src>
import jax
import jax.numpy as jnp
import numpy as np
from jax.experimental import pallas as pl
from jax.experimental.pallas import tpu as pltpu

# ----------------------- model dimensions (small) ------------------------
B = 2          # batch
IN_DIM = 4     # in_dim
HID = 8        # hid_dim
OUT = 8        # out_dim
K1 = 3         # kernal_1 (odd -> 'same' padding)
K2 = 3         # kernal_2 (odd -> 'same' padding)
MAX_LEN = 16   # max_len
CMPD = 16      # cmpd_dim
LAST_HID = 32  # last_hid
EPS = 1e-5

L = MAX_LEN
R = B * L                      # flattened (batch, length) rows
PACK_W = 32                    # lane width of the packed parameter block
OUT_ROWS = 8                   # sublane-padded output tile
OUT_LANES = 128                # lane-dense output tile

E_DIM = MAX_LEN * HID + CMPD           # fc_early input dim (144)
M_DIM = 2 * MAX_LEN * OUT + CMPD       # fc_1 input dim (272)


# ======================= host-side parameter packing ======================
def _to_col(w):
    """Conv weight (Cout, Cin, K) -> im2col layout (K*Cin, Cout)."""
    w = np.asarray(w, np.float32)
    return np.transpose(w, (2, 1, 0)).reshape(-1, w.shape[0])


def _pack(entries):
    """Pack named 2-D arrays into one (rows, PACK_W) f32 array.

    Each entry starts at a row offset that is a multiple of 8 (aligned sublane
    loads) and is zero-padded to PACK_W lanes.  Returns (packed, offsets, rows)
    with offsets[name] = (row0, nrows, ncols).
    """
    offs, rows, r = {}, [], 0
    for name, a in entries:
        a = np.asarray(a, np.float32)
        if a.ndim == 1:
            a = a.reshape(1, -1)
        nr, nc = a.shape
        assert nc <= PACK_W, (name, a.shape)
        buf = np.zeros((nr, PACK_W), np.float32)
        buf[:, :nc] = a
        rows.append(buf)
        offs[name] = (r, nr, nc)
        r += nr
        pad = (-r) % 8
        if pad:
            rows.append(np.zeros((pad, PACK_W), np.float32))
            r += pad
    return jnp.asarray(np.concatenate(rows, axis=0)), offs, r


def prepare_packed(p):
    """One-time host-side reshape/transposes of all weights into kernel layout."""
    f32 = lambda a: np.asarray(a, np.float32)

    w1_col = _to_col(p["conv1_w"])                       # (K1*IN_DIM, HID)
    w2_col = np.concatenate(
        [_to_col(p["conv21_w"]), _to_col(p["conv22_w"])], axis=1)  # (K2*HID, OUT+HID)
    b2_cat = np.concatenate([f32(p["conv21_b"]), f32(p["conv22_b"])]).reshape(1, -1)
    w3_col = _to_col(p["conv3_w"])                       # (K2*HID, OUT)

    # fc_early: conv part in (l, c) "tap" layout for the elementwise/VPU path,
    # compound part as a (1, CMPD) row for a lane reduction.
    fce_w = f32(p["fce_w"])                              # (1, E_DIM)
    we_conv = fce_w[0, :L * HID].reshape(HID, L).T       # (L, HID), [l, c]
    we_cmpd = fce_w[:, L * HID:]                         # (1, CMPD)

    # fc_1: conv part stacked (l, ch)-major so the in-kernel (B, L*2*OUT)
    # flattened operand contracts against it in one matmul; compound block
    # appended so fc_1 is a single K=272 contraction.
    fc1_w = f32(p["fc1_w"])                              # (LAST_HID, M_DIM)
    w1_conv = fc1_w[:, :2 * OUT * L].reshape(LAST_HID, 2 * OUT, L)   # [j, ch, l]
    w1_stack = np.transpose(w1_conv, (2, 1, 0)).reshape(L * 2 * OUT, LAST_HID)
    w1_cmpd = fc1_w[:, 2 * OUT * L:].T                   # (CMPD, LAST_HID)
    w1_full = np.concatenate([w1_stack, w1_cmpd], axis=0)            # (M_DIM, LAST_HID)

    entries = [
        ("gamma", f32(p["norm_gamma"])), ("beta", f32(p["norm_beta"])),
        ("w1", w1_col), ("b1", f32(p["conv1_b"])),
        ("w2", w2_col), ("b2", b2_cat),
        ("w3", w3_col), ("b3", f32(p["conv3_b"])),
        ("we_conv", we_conv), ("we_cmpd", we_cmpd), ("be", f32(p["fce_b"]).reshape(1, 1)),
        ("w1_full", w1_full), ("b1fc", f32(p["fc1_b"])),
        ("w2fc", f32(p["fc2_w"]).T), ("b2fc", f32(p["fc2_b"])),
        ("w3fc", f32(p["fc3_w"])), ("b3fc", f32(p["fc3_b"]).reshape(1, 1)),
    ]
    return _pack(entries)


# ============================ fused kernel ================================
def make_forward(offs, n_rows):
    def kernel(x_ref, cmpd_ref, p_ref, out_ref, cat_scr):
        def getp(name):
            r0, nr, nc = offs[name]
            return p_ref[r0:r0 + nr, 0:nc]

        def dot(a, b):
            return jnp.dot(a, b, preferred_element_type=jnp.float32)

        # l = position-within-sequence for every flattened row r = b*L + l
        li = jax.lax.broadcasted_iota(jnp.int32, (R, 1), 0) % L

        # Boundary masks for 'same' padding, hoisted: K1 == K2 == 3, so all
        # three convs share the +/-1 masks (computed once, not per conv).
        shifts = sorted({t - (k - 1) // 2 for k in (K1, K2) for t in range(k)} - {0})
        masks = {}
        for s in shifts:
            if s > 0:
                masks[s] = (li < (L - s)).astype(jnp.float32)
            else:
                masks[s] = (li >= (-s)).astype(jnp.float32)

        def im2col(v, k):
            """(R, C) activation -> (R, k*C) 'same'-padded im2col operand."""
            p = (k - 1) // 2
            cols = []
            for t in range(k):
                s = t - p                         # tap t reads row l + s
                if s == 0:
                    cols.append(v)
                else:
                    sh = pltpu.roll(v, (-s) % R, 0)   # sh[r] = v[r + s] (cyclic)
                    cols.append(sh * masks[s])        # zero at sequence/batch edges
            return jnp.concatenate(cols, axis=1)

        def rows_to_lanes(src_ref, ncols):
            """(B*L, C) scratch ref -> (B, L*C) value, flat index = l*C + c."""
            blocks = [src_ref[pl.ds(l, B, stride=L), :] for l in range(L)]
            return jnp.concatenate(blocks, axis=1)

        # ---- BatchNorm1d (training mode: batch stats, biased variance) ----
        # Fused statistics: one cross-sublane mean over [x, x*x].
        x = x_ref[...].reshape(R, IN_DIM)
        stats = jnp.mean(jnp.concatenate([x, x * x], axis=1), axis=0, keepdims=True)
        mu = stats[:, :IN_DIM]
        var = stats[:, IN_DIM:] - mu * mu
        xn = (x - mu) * jax.lax.rsqrt(var + EPS) * getp("gamma") + getp("beta")

        # ---- conv1 + relu : one matmul over all batches ----
        h = jnp.maximum(dot(im2col(xn, K1), getp("w1")) + getp("b1"), 0.0)   # (R, HID)

        # ---- conv2_1 & conv2_2 fused into one matmul ----
        y2 = jnp.maximum(dot(im2col(h, K2), getp("w2")) + getp("b2"), 0.0)   # (R, OUT+HID)
        o1 = y2[:, :OUT]                                                     # (R, OUT)
        o2 = y2[:, OUT:OUT + HID] + h                                        # residual

        # ---- fc_early on [flatten(o2), compound] -> sigmoid (VPU/XLU path) ----
        cmpd = cmpd_ref[...]
        prod = o2.reshape(B, L, HID) * getp("we_conv").reshape(1, L, HID)
        e_conv = jnp.sum(jnp.sum(prod, axis=2), axis=1, keepdims=True)       # (B, 1)
        e_cmpd = jnp.sum(cmpd * getp("we_cmpd"), axis=1, keepdims=True)      # (B, 1)
        single = jax.nn.sigmoid(e_conv + e_cmpd + getp("be"))

        # ---- conv3 + relu ----
        o2b = jnp.maximum(dot(im2col(o2, K2), getp("w3")) + getp("b3"), 0.0)  # (R, OUT)

        # ---- fc_1 on [flatten(o1), flatten(o2b), compound] -> fc_2 -> fc_3 ----
        # Relayout rows -> lanes through a tiny VMEM scratch (static strided
        # loads), then ONE (B, M_DIM) x (M_DIM, LAST_HID) matmul: the
        # L-reduction and the compound block are folded into the MXU K dim.
        cat_scr[...] = jnp.concatenate([o1, o2b], axis=1)                    # (R, 2*OUT)
        catflat = rows_to_lanes(cat_scr, 2 * OUT)                            # (B, L*2*OUT)
        m_op = jnp.concatenate([catflat, cmpd], axis=1)                      # (B, M_DIM)
        h1 = jnp.maximum(dot(m_op, getp("w1_full")) + getp("b1fc"), 0.0)     # (B, LAST_HID)
        h2 = jnp.maximum(dot(h1, getp("w2fc")) + getp("b2fc"), 0.0)          # (B, LAST_HID)
        # fc_3 tail as a VPU multiply + lane reduction (no MXU pop on the tail).
        y = jnp.sum(h2 * getp("w3fc"), axis=1, keepdims=True) + getp("b3fc")  # (B, 1)

        # ---- single lane-dense output tile: col 0 = y, col 1 = single ----
        out_ref[...] = jnp.zeros((OUT_ROWS, OUT_LANES), jnp.float32)
        out_ref[0:B, :] = jnp.concatenate(
            [y, single, jnp.zeros((B, OUT_LANES - 2), jnp.float32)], axis=1)

    def _full_spec(shape):
        n = len(shape)
        return pl.BlockSpec(shape, lambda i, n=n: (0,) * n)

    call = pl.pallas_call(
        kernel,
        out_shape=jax.ShapeDtypeStruct((OUT_ROWS, OUT_LANES), jnp.float32),
        grid=(1,),
        in_specs=[_full_spec((B, MAX_LEN, IN_DIM)),
                  _full_spec((B, CMPD)),
                  _full_spec((n_rows, PACK_W))],
        out_specs=_full_spec((OUT_ROWS, OUT_LANES)),
        scratch_shapes=[pltpu.VMEM((R, 2 * OUT), jnp.float32)],
        compiler_params=pltpu.CompilerParams(dimension_semantics=("arbitrary",)),
    )

    @jax.jit
    def forward(packed_params, enc_inputs, compound):
        out = call(enc_inputs.astype(jnp.float32),
                   compound.astype(jnp.float32),
                   packed_params)
        return out[:B, 0:1], out[:B, 1:2]

    return forward


# ============================ parameters ==================================
def init_params(key):
    """Deterministic synthetic params in PyTorch shapes."""
    ks = jax.random.split(key, 20)
    n = lambda k, s, sc=0.1: (sc * jax.random.normal(k, s)).astype(jnp.float32)
    return {
        "norm_gamma": 1.0 + n(ks[0], (IN_DIM,), 0.05),
        "norm_beta": n(ks[1], (IN_DIM,), 0.05),
        "conv1_w": n(ks[2], (HID, IN_DIM, K1)), "conv1_b": n(ks[3], (HID,)),
        "conv21_w": n(ks[4], (OUT, HID, K2)), "conv21_b": n(ks[5], (OUT,)),
        "conv22_w": n(ks[6], (HID, HID, K2)), "conv22_b": n(ks[7], (HID,)),
        "conv3_w": n(ks[8], (OUT, HID, K2)), "conv3_b": n(ks[9], (OUT,)),
        "fce_w": n(ks[10], (1, E_DIM)), "fce_b": n(ks[11], (1,)),
        "fc1_w": n(ks[12], (LAST_HID, M_DIM)), "fc1_b": n(ks[13], (LAST_HID,)),
        "fc2_w": n(ks[14], (LAST_HID, LAST_HID)), "fc2_b": n(ks[15], (LAST_HID,)),
        "fc3_w": n(ks[16], (1, LAST_HID)), "fc3_b": n(ks[17], (1,)),
    }


# ===================== pure-JAX reference (for checking) ==================
def ref_forward(params, enc_inputs, compound):
    p = params
    x = jnp.transpose(enc_inputs, (0, 2, 1))                 # (B, C, L) like PyTorch
    mu = x.mean(axis=(0, 2), keepdims=True)
    var = ((x - mu) ** 2).mean(axis=(0, 2), keepdims=True)
    xn = (x - mu) / jnp.sqrt(var + EPS) * p["norm_gamma"].reshape(1, -1, 1) \
        + p["norm_beta"].reshape(1, -1, 1)

    def conv1d(x, w, b, pad):
        y = jax.lax.conv_general_dilated(
            x, w, (1,), [(pad, pad)], dimension_numbers=("NCH", "OIH", "NCH"))
        return y + b.reshape(1, -1, 1)

    h = jax.nn.relu(conv1d(xn, p["conv1_w"], p["conv1_b"], (K1 - 1) // 2))
    o1 = jax.nn.relu(conv1d(h, p["conv21_w"], p["conv21_b"], (K2 - 1) // 2))
    o2 = jax.nn.relu(conv1d(h, p["conv22_w"], p["conv22_b"], (K2 - 1) // 2)) + h
    single = jax.nn.sigmoid(
        jnp.concatenate([o2.reshape(B, -1), compound], 1) @ p["fce_w"].T + p["fce_b"])
    o2b = jax.nn.relu(conv1d(o2, p["conv3_w"], p["conv3_b"], (K2 - 1) // 2))
    m = jnp.concatenate([o1.reshape(B, -1), o2b.reshape(B, -1), compound], 1)
    hh = jax.nn.relu(m @ p["fc1_w"].T + p["fc1_b"])
    hh = jax.nn.relu(hh @ p["fc2_w"].T + p["fc2_b"])
    y = hh @ p["fc3_w"].T + p["fc3_b"]                       # no final sigmoid
    return y, single


# ================================ main ====================================
if __name__ == "__main__":
    key = jax.random.PRNGKey(0)
    k_p, k_x, k_c = jax.random.split(key, 3)
    params = init_params(k_p)
    enc_inputs = jax.random.normal(k_x, (B, MAX_LEN, IN_DIM), dtype=jnp.float32)
    compound = jax.random.normal(k_c, (B, CMPD), dtype=jnp.float32)

    packed, offs, n_rows = prepare_packed(params)   # one-time host-side packing
    forward = make_forward(offs, n_rows)

    y, single = forward(packed, enc_inputs, compound)
    jax.block_until_ready((y, single))

    y_ref, single_ref = ref_forward(params, enc_inputs, compound)
    np.testing.assert_allclose(np.asarray(y), np.asarray(y_ref), rtol=2e-4, atol=2e-5)
    np.testing.assert_allclose(np.asarray(single), np.asarray(single_ref),
                               rtol=2e-4, atol=2e-5)

    print("KERNEL_OK")
</pallas_src>

<mosaic_0001>
module attributes {stable_mosaic.version = 11 : i64} {
  func.func @kernel(%arg0: i32, %arg1: memref<2x16x4xf32, #tpu.memory_space<vmem>>, %arg2: memref<2x16xf32, #tpu.memory_space<vmem>>, %arg3: memref<472x32xf32, #tpu.memory_space<vmem>>, %arg4: memref<8x128xf32, #tpu.memory_space<vmem>>, %arg5: memref<32x16xf32, #tpu.memory_space<vmem>>) attributes {dimension_semantics = [#tpu.dimension_semantics<arbitrary>], iteration_bounds = array<i64: 1>, scalar_prefetch = 0 : i64, scratch_operands = 1 : i64, tpu.core_type = #tpu.core_type<tc>, window_params = [{pipeline_mode = #tpu.pipeline_mode<synchronous>, transform_indices = @transform_0, window_bounds = array<i64: 2, 16, 4>}, {pipeline_mode = #tpu.pipeline_mode<synchronous>, transform_indices = @transform_1, window_bounds = array<i64: 2, 16>}, {pipeline_mode = #tpu.pipeline_mode<synchronous>, transform_indices = @transform_2, window_bounds = array<i64: 472, 32>}, {pipeline_mode = #tpu.pipeline_mode<synchronous>, transform_indices = @transform_3, window_bounds = array<i64: 8, 128>}]} {
    %0 = tpu.iota {dimensions = array<i32: 0>} : vector<32x1xi32>
    %c16_i32 = arith.constant 16 : i32
    %c0_i32 = arith.constant 0 : i32
    %1 = arith.cmpi eq, %c16_i32, %c0_i32 : i32
    %c1_i32 = arith.constant 1 : i32
    %2 = arith.select %1, %c1_i32, %c16_i32 : i32
    %3 = vector.broadcast %2 : i32 to vector<32x1xi32>
    %4 = arith.remsi %0, %3 : vector<32x1xi32>
    %c0_i32_0 = arith.constant 0 : i32
    %5 = vector.broadcast %c0_i32_0 : i32 to vector<32x1xi32>
    %6 = arith.cmpi ne, %4, %5 : vector<32x1xi32>
    %c0_i32_1 = arith.constant 0 : i32
    %7 = vector.broadcast %c0_i32_1 : i32 to vector<32x1xi32>
    %8 = arith.cmpi slt, %4, %7 : vector<32x1xi32>
    %c0_i32_2 = arith.constant 0 : i32
    %9 = arith.cmpi slt, %2, %c0_i32_2 : i32
    %10 = vector.broadcast %9 : i1 to vector<32x1xi1>
    %11 = vector.broadcast %10 : vector<32x1xi1> to vector<32x1xi1>
    %12 = arith.xori %8, %11 : vector<32x1xi1>
    %13 = arith.andi %12, %6 : vector<32x1xi1>
    %14 = vector.broadcast %2 : i32 to vector<32x1xi32>
    %15 = arith.addi %4, %14 : vector<32x1xi32>
    %16 = arith.select %13, %15, %4 : vector<32x1xi1>, vector<32x1xi32>
    %c1_i32_3 = arith.constant 1 : i32
    %17 = vector.broadcast %c1_i32_3 : i32 to vector<32x1xi32>
    %18 = arith.cmpi sge, %16, %17 : vector<32x1xi32>
    %19 = arith.extui %18 : vector<32x1xi1> to vector<32x1xi32>
    %20 = arith.sitofp %19 : vector<32x1xi32> to vector<32x1xf32>
    %c15_i32 = arith.constant 15 : i32
    %21 = vector.broadcast %c15_i32 : i32 to vector<32x1xi32>
    %22 = arith.cmpi slt, %16, %21 : vector<32x1xi32>
    %23 = arith.extui %22 : vector<32x1xi1> to vector<32x1xi32>
    %24 = arith.sitofp %23 : vector<32x1xi32> to vector<32x1xf32>
    %c0 = arith.constant 0 : index
    %c0_4 = arith.constant 0 : index
    %c0_5 = arith.constant 0 : index
    %25 = vector.load %arg1[%c0, %c0_4, %c0_5] : memref<2x16x4xf32, #tpu.memory_space<vmem>>, vector<2x16x4xf32>
    %26 = vector.shape_cast %25 : vector<2x16x4xf32> to vector<32x4xf32>
    %27 = arith.mulf %26, %26 : vector<32x4xf32>
    %28 = tpu.concatenate %26, %27 in 1 : vector<32x4xf32>, vector<32x4xf32> -> vector<32x8xf32>
    %cst = arith.constant dense<0.000000e+00> : vector<8xf32>
    %29 = vector.multi_reduction <add>, %28, %cst [0] : vector<32x8xf32> to vector<8xf32>
    %30 = vector.shape_cast %29 : vector<8xf32> to vector<1x8xf32>
    %cst_6 = arith.constant 3.200000e+01 : f32
    %31 = vector.broadcast %cst_6 : f32 to vector<1x8xf32>
    %32 = arith.divf %30, %31 : vector<1x8xf32>
    %33 = vector.extract_strided_slice %32 {offsets = [0, 0], sizes = [1, 4], strides = [1, 1]} : vector<1x8xf32> to vector<1x4xf32>
    %34 = vector.extract_strided_slice %32 {offsets = [0, 4], sizes = [1, 4], strides = [1, 1]} : vector<1x8xf32> to vector<1x4xf32>
    %35 = arith.mulf %33, %33 : vector<1x4xf32>
    %36 = arith.subf %34, %35 : vector<1x4xf32>
    %37 = vector.broadcast %33 : vector<1x4xf32> to vector<32x4xf32>
    %38 = arith.subf %26, %37 : vector<32x4xf32>
    %cst_7 = arith.constant 9.99999974E-6 : f32
    %39 = vector.broadcast %cst_7 : f32 to vector<1x4xf32>
    %40 = arith.addf %36, %39 : vector<1x4xf32>
    %41 = math.rsqrt %40 : vector<1x4xf32>
    %42 = vector.broadcast %41 : vector<1x4xf32> to vector<32x4xf32>
    %43 = arith.mulf %38, %42 : vector<32x4xf32>
    %c0_8 = arith.constant 0 : index
    %c0_9 = arith.constant 0 : index
    %44 = vector.load %arg3[%c0_8, %c0_9] : memref<472x32xf32, #tpu.memory_space<vmem>>, vector<1x4xf32>
    %45 = vector.broadcast %44 : vector<1x4xf32> to vector<32x4xf32>
    %46 = arith.mulf %43, %45 : vector<32x4xf32>
    %c8 = arith.constant 8 : index
    %c0_10 = arith.constant 0 : index
    %47 = vector.load %arg3[%c8, %c0_10] : memref<472x32xf32, #tpu.memory_space<vmem>>, vector<1x4xf32>
    %48 = vector.broadcast %47 : vector<1x4xf32> to vector<32x4xf32>
    %49 = arith.addf %46, %48 : vector<32x4xf32>
    %c1_i32_11 = arith.constant 1 : i32
    %50 = tpu.dynamic_rotate %49 by %c1_i32_11 dim 0 : vector<32x4xf32>, i32 -> vector<32x4xf32>
    %51 = vector.broadcast %20 : vector<32x1xf32> to vector<32x4xf32>
    %52 = arith.mulf %50, %51 : vector<32x4xf32>
    %c31_i32 = arith.constant 31 : i32
    %53 = tpu.dynamic_rotate %49 by %c31_i32 dim 0 : vector<32x4xf32>, i32 -> vector<32x4xf32>
    %54 = vector.broadcast %24 : vector<32x1xf32> to vector<32x4xf32>
    %55 = arith.mulf %53, %54 : vector<32x4xf32>
    %56 = tpu.concatenate %52, %49, %55 in 1 : vector<32x4xf32>, vector<32x4xf32>, vector<32x4xf32> -> vector<32x12xf32>
    %c16 = arith.constant 16 : index
    %c0_12 = arith.constant 0 : index
    %57 = vector.load %arg3[%c16, %c0_12] : memref<472x32xf32, #tpu.memory_space<vmem>>, vector<12x8xf32>
    %cst_13 = arith.constant dense<0.000000e+00> : vector<32x8xf32>
    %58 = tpu.matmul %56, %57, %cst_13 {dimension_numbers = #tpu.dot_dimension_numbers<[1], [0], [0], [1], [0, 0, 1, 1], [], []>} : vector<32x12xf32>, vector<12x8xf32>, vector<32x8xf32> -> vector<32x8xf32>
    %c32 = arith.constant 32 : index
    %c0_14 = arith.constant 0 : index
    %59 = vector.load %arg3[%c32, %c0_14] : memref<472x32xf32, #tpu.memory_space<vmem>>, vector<1x8xf32>
    %60 = vector.broadcast %59 : vector<1x8xf32> to vector<32x8xf32>
    %61 = arith.addf %58, %60 : vector<32x8xf32>
    %cst_15 = arith.constant 0.000000e+00 : f32
    %62 = vector.broadcast %cst_15 : f32 to vector<32x8xf32>
    %63 = arith.maximumf %61, %62 : vector<32x8xf32>
    %c1_i32_16 = arith.constant 1 : i32
    %64 = tpu.dynamic_rotate %63 by %c1_i32_16 dim 0 : vector<32x8xf32>, i32 -> vector<32x8xf32>
    %65 = vector.broadcast %20 : vector<32x1xf32> to vector<32x8xf32>
    %66 = arith.mulf %64, %65 : vector<32x8xf32>
    %c31_i32_17 = arith.constant 31 : i32
    %67 = tpu.dynamic_rotate %63 by %c31_i32_17 dim 0 : vector<32x8xf32>, i32 -> vector<32x8xf32>
    %68 = vector.broadcast %24 : vector<32x1xf32> to vector<32x8xf32>
    %69 = arith.mulf %67, %68 : vector<32x8xf32>
    %70 = tpu.concatenate %66, %63, %69 in 1 : vector<32x8xf32>, vector<32x8xf32>, vector<32x8xf32> -> vector<32x24xf32>
    %c40 = arith.constant 40 : index
    %c0_18 = arith.constant 0 : index
    %71 = vector.load %arg3[%c40, %c0_18] : memref<472x32xf32, #tpu.memory_space<vmem>>, vector<24x16xf32>
    %cst_19 = arith.constant dense<0.000000e+00> : vector<32x16xf32>
    %72 = tpu.matmul %70, %71, %cst_19 {dimension_numbers = #tpu.dot_dimension_numbers<[1], [0], [0], [1], [0, 0, 1, 1], [], []>} : vector<32x24xf32>, vector<24x16xf32>, vector<32x16xf32> -> vector<32x16xf32>
    %c64 = arith.constant 64 : index
    %c0_20 = arith.constant 0 : index
    %73 = vector.load %arg3[%c64, %c0_20] : memref<472x32xf32, #tpu.memory_space<vmem>>, vector<1x16xf32>
    %74 = vector.broadcast %73 : vector<1x16xf32> to vector<32x16xf32>
    %75 = arith.addf %72, %74 : vector<32x16xf32>
    %cst_21 = arith.constant 0.000000e+00 : f32
    %76 = vector.broadcast %cst_21 : f32 to vector<32x16xf32>
    %77 = arith.maximumf %75, %76 : vector<32x16xf32>
    %78 = vector.extract_strided_slice %77 {offsets = [0, 0], sizes = [32, 8], strides = [1, 1]} : vector<32x16xf32> to vector<32x8xf32>
    %79 = vector.extract_strided_slice %77 {offsets = [0, 8], sizes = [32, 8], strides = [1, 1]} : vector<32x16xf32> to vector<32x8xf32>
    %80 = arith.addf %79, %63 : vector<32x8xf32>
    %c0_22 = arith.constant 0 : index
    %c0_23 = arith.constant 0 : index
    %81 = vector.load %arg2[%c0_22, %c0_23] : memref<2x16xf32, #tpu.memory_space<vmem>>, vector<2x16xf32>
    %82 = vector.shape_cast %80 : vector<32x8xf32> to vector<2x16x8xf32>
    %c104 = arith.constant 104 : index
    %c0_24 = arith.constant 0 : index
    %83 = vector.load %arg3[%c104, %c0_24] : memref<472x32xf32, #tpu.memory_space<vmem>>, vector<16x8xf32>
    %84 = vector.shape_cast %83 : vector<16x8xf32> to vector<1x16x8xf32>
    %85 = vector.broadcast %84 : vector<1x16x8xf32> to vector<2x16x8xf32>
    %86 = arith.mulf %82, %85 : vector<2x16x8xf32>
    %cst_25 = arith.constant dense<0.000000e+00> : vector<2x16xf32>
    %87 = vector.multi_reduction <add>, %86, %cst_25 [2] : vector<2x16x8xf32> to vector<2x16xf32>
    %cst_26 = arith.constant dense<0.000000e+00> : vector<2xf32>
    %88 = vector.multi_reduction <add>, %87, %cst_26 [1] : vector<2x16xf32> to vector<2xf32>
    %89 = vector.shape_cast %88 : vector<2xf32> to vector<2x1xf32>
    %c120 = arith.constant 120 : index
    %c0_27 = arith.constant 0 : index
    %90 = vector.load %arg3[%c120, %c0_27] : memref<472x32xf32, #tpu.memory_space<vmem>>, vector<1x16xf32>
    %91 = vector.broadcast %90 : vector<1x16xf32> to vector<2x16xf32>
    %92 = arith.mulf %81, %91 : vector<2x16xf32>
    %cst_28 = arith.constant dense<0.000000e+00> : vector<2xf32>
    %93 = vector.multi_reduction <add>, %92, %cst_28 [1] : vector<2x16xf32> to vector<2xf32>
    %94 = vector.shape_cast %93 : vector<2xf32> to vector<2x1xf32>
    %95 = arith.addf %89, %94 : vector<2x1xf32>
    %c128 = arith.constant 128 : index
    %c0_29 = arith.constant 0 : index
    %96 = vector.load %arg3[%c128, %c0_29] : memref<472x32xf32, #tpu.memory_space<vmem>>, vector<1x1xf32>
    %97 = vector.broadcast %96 : vector<1x1xf32> to vector<2x1xf32>
    %98 = arith.addf %95, %97 : vector<2x1xf32>
    %99 = arith.negf %98 : vector<2x1xf32>
    %100 = math.exp %99 : vector<2x1xf32>
    %cst_30 = arith.constant 1.000000e+00 : f32
    %101 = vector.broadcast %cst_30 : f32 to vector<2x1xf32>
    %102 = arith.addf %101, %100 : vector<2x1xf32>
    %103 = arith.divf %101, %102 : vector<2x1xf32>
    %c1_i32_31 = arith.constant 1 : i32
    %104 = tpu.dynamic_rotate %80 by %c1_i32_31 dim 0 : vector<32x8xf32>, i32 -> vector<32x8xf32>
    %105 = vector.broadcast %20 : vector<32x1xf32> to vector<32x8xf32>
    %106 = arith.mulf %104, %105 : vector<32x8xf32>
    %c31_i32_32 = arith.constant 31 : i32
    %107 = tpu.dynamic_rotate %80 by %c31_i32_32 dim 0 : vector<32x8xf32>, i32 -> vector<32x8xf32>
    %108 = vector.broadcast %24 : vector<32x1xf32> to vector<32x8xf32>
    %109 = arith.mulf %107, %108 : vector<32x8xf32>
    %110 = tpu.concatenate %106, %80, %109 in 1 : vector<32x8xf32>, vector<32x8xf32>, vector<32x8xf32> -> vector<32x24xf32>
    %c72 = arith.constant 72 : index
    %c0_33 = arith.constant 0 : index
    %111 = vector.load %arg3[%c72, %c0_33] : memref<472x32xf32, #tpu.memory_space<vmem>>, vector<24x8xf32>
    %cst_34 = arith.constant dense<0.000000e+00> : vector<32x8xf32>
    %112 = tpu.matmul %110, %111, %cst_34 {dimension_numbers = #tpu.dot_dimension_numbers<[1], [0], [0], [1], [0, 0, 1, 1], [], []>} : vector<32x24xf32>, vector<24x8xf32>, vector<32x8xf32> -> vector<32x8xf32>
    %c96 = arith.constant 96 : index
    %c0_35 = arith.constant 0 : index
    %113 = vector.load %arg3[%c96, %c0_35] : memref<472x32xf32, #tpu.memory_space<vmem>>, vector<1x8xf32>
    %114 = vector.broadcast %113 : vector<1x8xf32> to vector<32x8xf32>
    %115 = arith.addf %112, %114 : vector<32x8xf32>
    %cst_36 = arith.constant 0.000000e+00 : f32
    %116 = vector.broadcast %cst_36 : f32 to vector<32x8xf32>
    %117 = arith.maximumf %115, %116 : vector<32x8xf32>
    %118 = tpu.concatenate %78, %117 in 1 : vector<32x8xf32>, vector<32x8xf32> -> vector<32x16xf32>
    %c0_37 = arith.constant 0 : index
    %c0_38 = arith.constant 0 : index
    %119 = vector.load %arg5[%c0_37, %c0_38] : memref<32x16xf32, #tpu.memory_space<vmem>>, vector<32x16xf32>
    tpu.vector_store %arg5[%c0_37, %c0_38], %118 {strides = array<i32>} : memref<32x16xf32, #tpu.memory_space<vmem>>, vector<32x16xf32>,
    %c0_39 = arith.constant 0 : index
    %c0_40 = arith.constant 0 : index
    %120 = tpu.strided_load %arg5[%c0_39, %c0_40] {strides = array<i32: 16, 1>} : memref<32x16xf32, #tpu.memory_space<vmem>>, vector<2x16xf32>
    %c1 = arith.constant 1 : index
    %c0_41 = arith.constant 0 : index
    %121 = tpu.strided_load %arg5[%c1, %c0_41] {strides = array<i32: 16, 1>} : memref<32x16xf32, #tpu.memory_space<vmem>>, vector<2x16xf32>
    %c2 = arith.constant 2 : index
    %c0_42 = arith.constant 0 : index
    %122 = tpu.strided_load %arg5[%c2, %c0_42] {strides = array<i32: 16, 1>} : memref<32x16xf32, #tpu.memory_space<vmem>>, vector<2x16xf32>
    %c3 = arith.constant 3 : index
    %c0_43 = arith.constant 0 : index
    %123 = tpu.strided_load %arg5[%c3, %c0_43] {strides = array<i32: 16, 1>} : memref<32x16xf32, #tpu.memory_space<vmem>>, vector<2x16xf32>
    %c4 = arith.constant 4 : index
    %c0_44 = arith.constant 0 : index
    %124 = tpu.strided_load %arg5[%c4, %c0_44] {strides = array<i32: 16, 1>} : memref<32x16xf32, #tpu.memory_space<vmem>>, vector<2x16xf32>
    %c5 = arith.constant 5 : index
    %c0_45 = arith.constant 0 : index
    %125 = tpu.strided_load %arg5[%c5, %c0_45] {strides = array<i32: 16, 1>} : memref<32x16xf32, #tpu.memory_space<vmem>>, vector<2x16xf32>
    %c6 = arith.constant 6 : index
    %c0_46 = arith.constant 0 : index
    %126 = tpu.strided_load %arg5[%c6, %c0_46] {strides = array<i32: 16, 1>} : memref<32x16xf32, #tpu.memory_space<vmem>>, vector<2x16xf32>
    %c7 = arith.constant 7 : index
    %c0_47 = arith.constant 0 : index
    %127 = tpu.strided_load %arg5[%c7, %c0_47] {strides = array<i32: 16, 1>} : memref<32x16xf32, #tpu.memory_space<vmem>>, vector<2x16xf32>
    %c8_48 = arith.constant 8 : index
    %c0_49 = arith.constant 0 : index
    %128 = tpu.strided_load %arg5[%c8_48, %c0_49] {strides = array<i32: 16, 1>} : memref<32x16xf32, #tpu.memory_space<vmem>>, vector<2x16xf32>
    %c9 = arith.constant 9 : index
    %c0_50 = arith.constant 0 : index
    %129 = tpu.strided_load %arg5[%c9, %c0_50] {strides = array<i32: 16, 1>} : memref<32x16xf32, #tpu.memory_space<vmem>>, vector<2x16xf32>
    %c10 = arith.constant 10 : index
    %c0_51 = arith.constant 0 : index
    %130 = tpu.strided_load %arg5[%c10, %c0_51] {strides = array<i32: 16, 1>} : memref<32x16xf32, #tpu.memory_space<vmem>>, vector<2x16xf32>
    %c11 = arith.constant 11 : index
    %c0_52 = arith.constant 0 : index
    %131 = tpu.strided_load %arg5[%c11, %c0_52] {strides = array<i32: 16, 1>} : memref<32x16xf32, #tpu.memory_space<vmem>>, vector<2x16xf32>
    %c12 = arith.constant 12 : index
    %c0_53 = arith.constant 0 : index
    %132 = tpu.strided_load %arg5[%c12, %c0_53] {strides = array<i32: 16, 1>} : memref<32x16xf32, #tpu.memory_space<vmem>>, vector<2x16xf32>
    %c13 = arith.constant 13 : index
    %c0_54 = arith.constant 0 : index
    %133 = tpu.strided_load %arg5[%c13, %c0_54] {strides = array<i32: 16, 1>} : memref<32x16xf32, #tpu.memory_space<vmem>>, vector<2x16xf32>
    %c14 = arith.constant 14 : index
    %c0_55 = arith.constant 0 : index
    %134 = tpu.strided_load %arg5[%c14, %c0_55] {strides = array<i32: 16, 1>} : memref<32x16xf32, #tpu.memory_space<vmem>>, vector<2x16xf32>
    %c15 = arith.constant 15 : index
    %c0_56 = arith.constant 0 : index
    %135 = tpu.strided_load %arg5[%c15, %c0_56] {strides = array<i32: 16, 1>} : memref<32x16xf32, #tpu.memory_space<vmem>>, vector<2x16xf32>
    %136 = tpu.concatenate %120, %121, %122, %123, %124, %125, %126, %127, %128, %129, %130, %131, %132, %133, %134, %135 in 1 : vector<2x16xf32>, vector<2x16xf32>, vector<2x16xf32>, vector<2x16xf32>, vector<2x16xf32>, vector<2x16xf32>, vector<2x16xf32>, vector<2x16xf32>, vector<2x16xf32>, vector<2x16xf32>, vector<2x16xf32>, vector<2x16xf32>, vector<2x16xf32>, vector<2x16xf32>, vector<2x16xf32>, vector<2x16xf32> -> vector<2x256xf32>
    %137 = tpu.concatenate %136, %81 in 1 : vector<2x256xf32>, vector<2x16xf32> -> vector<2x272xf32>
    %c136 = arith.constant 136 : index
    %c0_57 = arith.constant 0 : index
    %138 = vector.load %arg3[%c136, %c0_57] : memref<472x32xf32, #tpu.memory_space<vmem>>, vector<272x32xf32>
    %cst_58 = arith.constant dense<0.000000e+00> : vector<2x32xf32>
    %139 = tpu.matmul %137, %138, %cst_58 {dimension_numbers = #tpu.dot_dimension_numbers<[1], [0], [0], [1], [0, 0, 1, 1], [], []>} : vector<2x272xf32>, vector<272x32xf32>, vector<2x32xf32> -> vector<2x32xf32>
    %c408 = arith.constant 408 : index
    %c0_59 = arith.constant 0 : index
    %140 = vector.load %arg3[%c408, %c0_59] : memref<472x32xf32, #tpu.memory_space<vmem>>, vector<1x32xf32>
    %141 = vector.broadcast %140 : vector<1x32xf32> to vector<2x32xf32>
    %142 = arith.addf %139, %141 : vector<2x32xf32>
    %cst_60 = arith.constant 0.000000e+00 : f32
    %143 = vector.broadcast %cst_60 : f32 to vector<2x32xf32>
    %144 = arith.maximumf %142, %143 : vector<2x32xf32>
    %c416 = arith.constant 416 : index
    %c0_61 = arith.constant 0 : index
    %145 = vector.load %arg3[%c416, %c0_61] : memref<472x32xf32, #tpu.memory_space<vmem>>, vector<32x32xf32>
    %cst_62 = arith.constant dense<0.000000e+00> : vector<2x32xf32>
    %146 = tpu.matmul %144, %145, %cst_62 {dimension_numbers = #tpu.dot_dimension_numbers<[1], [0], [0], [1], [0, 0, 1, 1], [], []>} : vector<2x32xf32>, vector<32x32xf32>, vector<2x32xf32> -> vector<2x32xf32>
    %c448 = arith.constant 448 : index
    %c0_63 = arith.constant 0 : index
    %147 = vector.load %arg3[%c448, %c0_63] : memref<472x32xf32, #tpu.memory_space<vmem>>, vector<1x32xf32>
    %148 = vector.broadcast %147 : vector<1x32xf32> to vector<2x32xf32>
    %149 = arith.addf %146, %148 : vector<2x32xf32>
    %cst_64 = arith.constant 0.000000e+00 : f32
    %150 = vector.broadcast %cst_64 : f32 to vector<2x32xf32>
    %151 = arith.maximumf %149, %150 : vector<2x32xf32>
    %c456 = arith.constant 456 : index
    %c0_65 = arith.constant 0 : index
    %152 = vector.load %arg3[%c456, %c0_65] : memref<472x32xf32, #tpu.memory_space<vmem>>, vector<1x32xf32>
    %153 = vector.broadcast %152 : vector<1x32xf32> to vector<2x32xf32>
    %154 = arith.mulf %151, %153 : vector<2x32xf32>
    %cst_66 = arith.constant dense<0.000000e+00> : vector<2xf32>
    %155 = vector.multi_reduction <add>, %154, %cst_66 [1] : vector<2x32xf32> to vector<2xf32>
    %156 = vector.shape_cast %155 : vector<2xf32> to vector<2x1xf32>
    %c464 = arith.constant 464 : index
    %c0_67 = arith.constant 0 : index
    %157 = vector.load %arg3[%c464, %c0_67] : memref<472x32xf32, #tpu.memory_space<vmem>>, vector<1x1xf32>
    %158 = vector.broadcast %157 : vector<1x1xf32> to vector<2x1xf32>
    %159 = arith.addf %156, %158 : vector<2x1xf32>
    %cst_68 = arith.constant 0.000000e+00 : f32
    %160 = vector.broadcast %cst_68 : f32 to vector<8x128xf32>
    %c0_69 = arith.constant 0 : index
    %c0_70 = arith.constant 0 : index
    %161 = vector.load %arg4[%c0_69, %c0_70] : memref<8x128xf32, #tpu.memory_space<vmem>>, vector<8x128xf32>
    tpu.vector_store %arg4[%c0_69, %c0_70], %160 {strides = array<i32>} : memref<8x128xf32, #tpu.memory_space<vmem>>, vector<8x128xf32>,
    %cst_71 = arith.constant 0.000000e+00 : f32
    %162 = vector.broadcast %cst_71 : f32 to vector<2x126xf32>
    %163 = tpu.concatenate %159, %103, %162 in 1 : vector<2x1xf32>, vector<2x1xf32>, vector<2x126xf32> -> vector<2x128xf32>
    %c0_72 = arith.constant 0 : index
    %c0_73 = arith.constant 0 : index
    %164 = vector.load %arg4[%c0_72, %c0_73] : memref<8x128xf32, #tpu.memory_space<vmem>>, vector<2x128xf32>
    tpu.vector_store %arg4[%c0_72, %c0_73], %163 {strides = array<i32>} : memref<8x128xf32, #tpu.memory_space<vmem>>, vector<2x128xf32>,
    return
  }
  func.func @transform_0(%arg0: i32) -> (i32, i32, i32) {
    %c0_i32 = arith.constant 0 : i32
    %c0_i32_0 = arith.constant 0 : i32
    %c0_i32_1 = arith.constant 0 : i32
    %c0_i32_2 = arith.constant 0 : i32
    return %c0_i32, %c0_i32_0, %c0_i32_1 : i32, i32, i32
  }
  func.func @transform_1(%arg0: i32) -> (i32, i32) {
    %c0_i32 = arith.constant 0 : i32
    %c0_i32_0 = arith.constant 0 : i32
    %c0_i32_1 = arith.constant 0 : i32
    return %c0_i32, %c0_i32_0 : i32, i32
  }
  func.func @transform_2(%arg0: i32) -> (i32, i32) {
    %c0_i32 = arith.constant 0 : i32
    %c0_i32_0 = arith.constant 0 : i32
    %c0_i32_1 = arith.constant 0 : i32
    return %c0_i32, %c0_i32_0 : i32, i32
  }
  func.func @transform_3(%arg0: i32) -> (i32, i32) {
    %c0_i32 = arith.constant 0 : i32
    %c0_i32_0 = arith.constant 0 : i32
    %c0_i32_1 = arith.constant 0 : i32
    return %c0_i32, %c0_i32_0 : i32, i32
  }
}

</mosaic_0001>

<llo_original>
// kernel: forward.1
$region0: #{forward.1}
  #allocation0 [shape = 'u32[]', space=smem, size = 0x4, offset = 0x4, fixed_abs, tag = 'smem constant byte address 0x4 - core index']
  #allocation1 [shape = 'u32[72,128]{1,0:T(1,128)}', space=vmem, size = 0x9000, scoped, tag = 'internal scratch']
  #allocation2 [shape = 'f32[32,16]{1,0:T(8,128)}', space=vmem, size = 0x4000, scoped, tag = 'scratch operand']
  %s0 = inlined_call_operand.vmem [shape: f32[2,16,4], index: 0, kind: input, shape index: {}]
  %s1 = inlined_call_operand.vmem [shape: f32[2,16], index: 1, kind: input, shape index: {}]
  %s2 = inlined_call_operand.vmem [shape: f32[472,32], index: 2, kind: input, shape index: {}]
  %s3 = inlined_call_operand.vmem [shape: f32[8,128], index: 3, kind: output, shape index: {}]
  %s4 = sld [smem:[#allocation0]]
  $region22: #{forward.1} parent=0
    _
  %s6 = ssub.s32 1, %s4
  %s7 = scalar_select 0, %s6, %s4
  // Predicated region
  $region2: #{forward.1} parent=0 // pred_check
    _
  $region3: #{forward.1} parent=0 // pred_check_branch
    %9 = sbr.rel (0) target = $region5
  $region4: #{forward.1} parent=0 // pred_region
    _
  $region5: #{forward.1} parent=0 // pred_fallthru
    _
  // Predicated region
  $region6: #{forward.1} parent=0 // pred_check
    _
  $region7: #{forward.1} parent=0 // pred_check_branch
    %11 = sbr.rel (0) target = $region9
  $region8: #{forward.1} parent=0 // pred_region
    _
  $region9: #{forward.1} parent=0 // pred_fallthru
    _
  // Predicated region
  $region10: #{forward.1} parent=0 // pred_check
    _
  $region11: #{forward.1} parent=0 // pred_check_branch
    %13 = sbr.rel (0) target = $region13
  $region12: #{forward.1} parent=0 // pred_region
    _
  $region13: #{forward.1} parent=0 // pred_fallthru
    _
  %v14 = vlaneseq
  %v15 = vshrl.u32 %v14, 7
  %v16 = vadd.s32 %v15, 8
  %v17 = vadd.s32 %v15, 16
  %v18 = vadd.s32 %v15, 24
  %vm19 = vcmp.lt.s32.totalorder %v15, 0
  %v20 = vsub.s32 0, %v15
  %v21 = vsel %vm19, %v20, %v15
  %v22 = vshrl.u32 %v21, 4
  %v23 = vand.u32 %v21, 15
  %v24 = vsub.s32 0, %v23
  %v25 = vsel %vm19, %v24, %v23
  %vm26 = vcmp.lt.s32.totalorder %v16, 0
  %v27 = vsub.s32 0, %v16
  %v28 = vsel %vm26, %v27, %v16
  %v29 = vshrl.u32 %v28, 4
  %v30 = vand.u32 %v28, 15
  %v31 = vsub.s32 0, %v30
  %v32 = vsel %vm26, %v31, %v30
  %vm33 = vcmp.lt.s32.totalorder %v17, 0
  %v34 = vsub.s32 0, %v17
  %v35 = vsel %vm33, %v34, %v17
  %v36 = vshrl.u32 %v35, 4
  %v37 = vand.u32 %v35, 15
  %v38 = vsub.s32 0, %v37
  %v39 = vsel %vm33, %v38, %v37
  %vm40 = vcmp.lt.s32.totalorder %v18, 0
  %v41 = vsub.s32 0, %v18
  %v42 = vsel %vm40, %v41, %v18
  %v43 = vshrl.u32 %v42, 4
  %v44 = vand.u32 %v42, 15
  %v45 = vsub.s32 0, %v44
  %v46 = vsel %vm40, %v45, %v44
  %vm47 = vcmp.ne.s32.totalorder %v25, 0
  %vm48 = vcmp.ne.s32.totalorder %v32, 0
  %vm49 = vcmp.ne.s32.totalorder %v39, 0
  %vm50 = vcmp.ne.s32.totalorder %v46, 0
  %vm51 = vcmp.lt.s32.totalorder %v25, 0
  %vm52 = vcmp.lt.s32.totalorder %v32, 0
  %vm53 = vcmp.lt.s32.totalorder %v39, 0
  %vm54 = vcmp.lt.s32.totalorder %v46, 0
  %vm55 = vmand %vm51, %vm47
  %vm56 = vmand %vm52, %vm48
  %vm57 = vmand %vm53, %vm49
  %vm58 = vmand %vm54, %vm50
  %v59 = vadd.s32 %v25, 16
  %v60 = vadd.s32 %v32, 16
  %v61 = vadd.s32 %v39, 16
  %v62 = vadd.s32 %v46, 16
  %v63 = vsel %vm55, %v59, %v25
  %v64 = vsel %vm56, %v60, %v32
  %v65 = vsel %vm57, %v61, %v39
  %v66 = vsel %vm58, %v62, %v46
  %vm67 = vcmp.ge.s32.totalorder %v63, 1
  %vm68 = vcmp.ge.s32.totalorder %v64, 1
  %vm69 = vcmp.ge.s32.totalorder %v65, 1
  %vm70 = vcmp.ge.s32.totalorder %v66, 1
  %v71 = vsel %vm67, 1, 0
  %v72 = vsel %vm68, 1, 0
  %v73 = vsel %vm69, 1, 0
  %v74 = vsel %vm70, 1, 0
  %v75 = vcvt.s32.f32 %v71
  %v76 = vcvt.s32.f32 %v72
  %v77 = vcvt.s32.f32 %v73
  %v78 = vcvt.s32.f32 %v74
  %vm79 = vcmp.lt.s32.totalorder %v63, 15
  %vm80 = vcmp.lt.s32.totalorder %v64, 15
  %vm81 = vcmp.lt.s32.totalorder %v65, 15
  %vm82 = vcmp.lt.s32.totalorder %v66, 15
  %v83 = vsel %vm79, 1, 0
  %v84 = vsel %vm80, 1, 0
  %v85 = vsel %vm81, 1, 0
  %v86 = vsel %vm82, 1, 0
  %v87 = vcvt.s32.f32 %v83
  %v88 = vcvt.s32.f32 %v84
  %v89 = vcvt.s32.f32 %v85
  %v90 = vcvt.s32.f32 %v86
  %v91 = vld [vmem:[%s0] sm:$0xff]
  %v92 = vld [vmem:[%s0 + $0x8] sm:$0xff]
  %v93 = vld [vmem:[%s0 + $0x10] sm:$0xff]
  %v94 = vld [vmem:[%s0 + $0x18] sm:$0xff]
  %v95 = vmul.f32 %v91, %v91
  %v96 = vmul.f32 %v92, %v92
  %v97 = vmul.f32 %v93, %v93
  %v98 = vmul.f32 %v94, %v94
  %103 = vrot.lane.b32.xlu0 %v95, 4
  %v104 = vpop.permute.xlu0 %103
  %105 = vrot.lane.b32.xlu0 %v96, 4
  %v106 = vpop.permute.xlu0 %105
  %107 = vrot.lane.b32.xlu0 %v97, 4
  %v108 = vpop.permute.xlu0 %107
  %109 = vrot.lane.b32.xlu0 %v98, 4
  %v110 = vpop.permute.xlu0 %109
  %vm115 = vcmask 31744
  %v116 = vsel %vm115, %v91, %v104
  %v117 = vsel %vm115, %v92, %v106
  %v118 = vsel %vm115, %v93, %v108
  %v119 = vsel %vm115, %v94, %v110
  %vm120 = vcmask 64512
  %v121 = vsel %vm120, %v116, 0.0
  %v122 = vsel %vm120, %v117, 0.0
  %v123 = vadd.f32 %v121, %v122
  %v124 = vsel %vm120, %v118, 0.0
  %v125 = vadd.f32 %v123, %v124
  %v126 = vsel %vm120, %v119, 0.0
  %v127 = vadd.f32 %v125, %v126
  %v128 = vrot.slane %v127, 4
  %v129 = vadd.f32 %v127, %v128
  %v130 = vrot.slane %v129, 2
  %v131 = vadd.f32 %v129, %v130
  %v132 = vrot.slane %v131, 1
  %v133 = vadd.f32 %v131, %v132
  %v134 = vrcp.pop 32.0
  %v135 = vmul.f32 32.0, %v134
  %v136 = vsub.f32 1.0, %v135
  %v137 = vmul.f32 %v134, %v136
  %v138 = vadd.f32 %v134, %v137
  %vm139 = vweird.f32 %v134
  %v140 = vsel %vm139, %v134, %v138
  %v141 = vmul.f32 %v133, %v140
  %v142 = vmul.f32 %v141, %v141
  %144 = vrot.lane.b32.xlu0 %v142, 4
  %v145 = vpop.permute.xlu0 %144
  %v147 = vsub.f32 %v141, %v145
  %v148 = vsub.f32 %v91, %v141
  %v149 = vsub.f32 %v92, %v141
  %v150 = vsub.f32 %v93, %v141
  %v151 = vsub.f32 %v94, %v141
  %v152 = vadd.f32 %v147, 1e-05
  %v153 = vrsqrt.pop %v152
  %v154 = vmul.f32 %v153, %v152
  %v155 = vmul.f32 %v154, %v153
  %v156 = vmul.f32 0.5, %v155
  %v157 = vsub.f32 1.5, %v156
  %v158 = vmul.f32 %v153, %v157
  %vm159 = vweird.f32 %v152
  %vm160 = vweird.f32 %v153
  %vm161 = vmor %vm159, %vm160
  %v162 = vsel %vm161, %v153, %v158
  %v163 = vperm.slane %v162, 0
  %165 = vrot.lane.b32.xlu0 %v163, 124
  %v166 = vpop.permute.xlu0 %165
  %v168 = vmul.f32 %v148, %v166
  %v169 = vmul.f32 %v149, %v166
  %v170 = vmul.f32 %v150, %v166
  %v171 = vmul.f32 %v151, %v166
  %v172 = vld [vmem:[%s2] sm:$0x1]
  %v173 = vperm.slane %v172, 0
  %v174 = vmul.f32 %v168, %v173
  %v175 = vmul.f32 %v169, %v173
  %v176 = vmul.f32 %v170, %v173
  %v177 = vmul.f32 %v171, %v173
  %v178 = vld [vmem:[%s2 + $0x8] sm:$0x1]
  %v179 = vperm.slane %v178, 0
  %v180 = vadd.f32 %v174, %v179
  %v181 = vadd.f32 %v175, %v179
  %v182 = vadd.f32 %v176, %v179
  %v183 = vadd.f32 %v177, %v179
  %v184 = vrot.slane %v180, 7
  %v185 = vrot.slane %v181, 7
  %v186 = vrot.slane %v182, 7
  %v187 = vrot.slane %v183, 7
  %vm188 = vcmp.lt.s32.totalorder %v15, 1
  %v189 = vsel %vm188, %v186, %v187
  %v190 = vsel %vm188, %v185, %v186
  %v191 = vsel %vm188, %v184, %v185
  %v192 = vsel %vm188, %v187, %v184
  %v193 = vmul.f32 %v192, %v75
  %v194 = vmul.f32 %v191, %v76
  %v195 = vmul.f32 %v190, %v77
  %v196 = vmul.f32 %v189, %v78
  %v197 = vrot.slane %v180, 1
  %v198 = vrot.slane %v181, 1
  %v199 = vrot.slane %v182, 1
  %v200 = vrot.slane %v183, 1
  %vm201 = vcmp.lt.s32.totalorder %v15, 7
  %v202 = vsel %vm201, %v199, %v200
  %v203 = vsel %vm201, %v198, %v199
  %v204 = vsel %vm201, %v197, %v198
  %v205 = vsel %vm201, %v200, %v197
  %v206 = vmul.f32 %v204, %v87
  %v207 = vmul.f32 %v203, %v88
  %v208 = vmul.f32 %v202, %v89
  %v209 = vmul.f32 %v205, %v90
  %214 = vrot.lane.b32.xlu0 %v180, 4
  %v215 = vpop.permute.xlu0 %214
  %216 = vrot.lane.b32.xlu0 %v181, 4
  %v217 = vpop.permute.xlu0 %216
  %218 = vrot.lane.b32.xlu0 %v182, 4
  %v219 = vpop.permute.xlu0 %218
  %220 = vrot.lane.b32.xlu0 %v183, 4
  %v221 = vpop.permute.xlu0 %220
  %230 = vrot.lane.b32.xlu0 %v206, 8
  %v231 = vpop.permute.xlu0 %230
  %232 = vrot.lane.b32.xlu0 %v207, 8
  %v233 = vpop.permute.xlu0 %232
  %234 = vrot.lane.b32.xlu0 %v208, 8
  %v235 = vpop.permute.xlu0 %234
  %236 = vrot.lane.b32.xlu0 %v209, 8
  %v237 = vpop.permute.xlu0 %236
  %v242 = vsel %vm115, %v193, %v215
  %v243 = vsel %vm115, %v194, %v217
  %v244 = vsel %vm115, %v195, %v219
  %v245 = vsel %vm115, %v196, %v221
  %v246 = vsel %vm120, %v242, %v231
  %v247 = vsel %vm120, %v243, %v233
  %v248 = vsel %vm120, %v244, %v235
  %v249 = vsel %vm120, %v245, %v237
  %v250 = vld [vmem:[%s2 + $0x10] sm:$0xff]
  %v251 = vld [vmem:[%s2 + $0x18] sm:$0xf]
  %v252 = vld [vmem:[%s2 + $0x20] sm:$0x1]
  %v253 = vperm.slane %v252, 0
  %vm254 = vcmask 97280
  %v256 = vsel %vm254, %v246, 0
  %v259 = vsel %vm254, %v247, 0
  %v262 = vsel %vm254, %v248, 0
  %v265 = vsel %vm254, %v249, 0
  %vm267 = vcmask 1043456
  %v269 = vsel %vm267, %v251, 0
  %271 = vmatpush.msra.mxu0 0.0
  %272 = vmatpush.msra.mxu0 0.0
  %273 = vmatpush.msra.mxu0 0.0
  %274 = vmatpush.msra.mxu0 0.0
  %275 = vmatpush.msra.mxu0 0.0
  %276 = vmatpush.msra.mxu0 0.0
  %277 = vmatpush.msra.mxu0 0.0
  %278 = vmatpush.msra.mxu0 0.0
  %279 = vmatpush.msra.mxu0 0.0
  %280 = vmatpush.msra.mxu0 0.0
  %281 = vmatpush.msra.mxu0 0.0
  %282 = vmatpush.msra.mxu0 0.0
  %283 = vmatpush.msra.mxu0 0.0
  %284 = vmatpush.msra.mxu0 0.0
  %285 = vmatpush.msra.mxu0 %v269
  %286 = vmatpush.msra.mxu0 %v250
  %287 = vmatmul.f32.gmra.mxu0 %v256
  %v288 = vpop.f32.mrf.mxu0
  %v289 = vadd.f32 %v253, %v288
  %290 = vmatmul.f32.gmra.mxu0 %v259
  %v291 = vpop.f32.mrf.mxu0
  %v292 = vadd.f32 %v253, %v291
  %293 = vmatmul.f32.gmra.mxu0 %v262
  %v294 = vpop.f32.mrf.mxu0
  %v295 = vadd.f32 %v253, %v294
  %296 = vmatmul.f32.gmra.mxu0 %v265
  %v297 = vpop.f32.mrf.mxu0
  %v298 = vadd.f32 %v253, %v297
  %299 = vdwg.mxu0
  %v300 = vmax.f32 %v289, 0.0
  %v301 = vmax.f32 %v292, 0.0
  %v302 = vmax.f32 %v295, 0.0
  %v303 = vmax.f32 %v298, 0.0
  %v304 = vrot.slane %v300, 7
  %v305 = vrot.slane %v301, 7
  %v306 = vrot.slane %v302, 7
  %v307 = vrot.slane %v303, 7
  %v308 = vsel %vm188, %v306, %v307
  %v309 = vsel %vm188, %v305, %v306
  %v310 = vsel %vm188, %v304, %v305
  %v311 = vsel %vm188, %v307, %v304
  %v312 = vmul.f32 %v311, %v75
  %v313 = vmul.f32 %v310, %v76
  %v314 = vmul.f32 %v309, %v77
  %v315 = vmul.f32 %v308, %v78
  %v316 = vrot.slane %v300, 1
  %v317 = vrot.slane %v301, 1
  %v318 = vrot.slane %v302, 1
  %v319 = vrot.slane %v303, 1
  %v320 = vsel %vm201, %v318, %v319
  %v321 = vsel %vm201, %v317, %v318
  %v322 = vsel %vm201, %v316, %v317
  %v323 = vsel %vm201, %v319, %v316
  %v324 = vmul.f32 %v322, %v87
  %v325 = vmul.f32 %v321, %v88
  %v326 = vmul.f32 %v320, %v89
  %v327 = vmul.f32 %v323, %v90
  %332 = vrot.lane.b32.xlu0 %v300, 8
  %v333 = vpop.permute.xlu0 %332
  %334 = vrot.lane.b32.xlu0 %v301, 8
  %v335 = vpop.permute.xlu0 %334
  %336 = vrot.lane.b32.xlu0 %v302, 8
  %v337 = vpop.permute.xlu0 %336
  %338 = vrot.lane.b32.xlu0 %v303, 8
  %v339 = vpop.permute.xlu0 %338
  %348 = vrot.lane.b32.xlu0 %v324, 16
  %v349 = vpop.permute.xlu0 %348
  %350 = vrot.lane.b32.xlu0 %v325, 16
  %v351 = vpop.permute.xlu0 %350
  %352 = vrot.lane.b32.xlu0 %v326, 16
  %v353 = vpop.permute.xlu0 %352
  %354 = vrot.lane.b32.xlu0 %v327, 16
  %v355 = vpop.permute.xlu0 %354
  %v360 = vsel %vm120, %v312, %v333
  %v361 = vsel %vm120, %v313, %v335
  %v362 = vsel %vm120, %v314, %v337
  %v363 = vsel %vm120, %v315, %v339
  %vm364 = vcmask 130048
  %v365 = vsel %vm364, %v360, %v349
  %v366 = vsel %vm364, %v361, %v351
  %v367 = vsel %vm364, %v362, %v353
  %v368 = vsel %vm364, %v363, %v355
  %v369 = vld [vmem:[%s2 + $0x28] sm:$0xff]
  %v370 = vld [vmem:[%s2 + $0x30] sm:$0xff]
  %v371 = vld [vmem:[%s2 + $0x38] sm:$0xff]
  %v372 = vld [vmem:[%s2 + $0x40] sm:$0x1]
  %v373 = vperm.slane %v372, 0
  %vm374 = vcmask 195584
  %v376 = vsel %vm374, %v365, 0
  %v379 = vsel %vm374, %v366, 0
  %v382 = vsel %vm374, %v367, 0
  %v385 = vsel %vm374, %v368, 0
  %387 = vmatpush.msra.mxu0 0.0
  %388 = vmatpush.msra.mxu0 0.0
  %389 = vmatpush.msra.mxu0 0.0
  %390 = vmatpush.msra.mxu0 0.0
  %391 = vmatpush.msra.mxu0 0.0
  %392 = vmatpush.msra.mxu0 0.0
  %393 = vmatpush.msra.mxu0 0.0
  %394 = vmatpush.msra.mxu0 0.0
  %395 = vmatpush.msra.mxu0 0.0
  %396 = vmatpush.msra.mxu0 0.0
  %397 = vmatpush.msra.mxu0 0.0
  %398 = vmatpush.msra.mxu0 0.0
  %399 = vmatpush.msra.mxu0 0.0
  %400 = vmatpush.msra.mxu0 %v371
  %401 = vmatpush.msra.mxu0 %v370
  %402 = vmatpush.msra.mxu0 %v369
  %403 = vmatmul.f32.gmra.mxu0 %v376
  %v404 = vpop.f32.mrf.mxu0
  %v405 = vadd.f32 %v373, %v404
  %406 = vmatmul.f32.gmra.mxu0 %v379
  %v407 = vpop.f32.mrf.mxu0
  %v408 = vadd.f32 %v373, %v407
  %409 = vmatmul.f32.gmra.mxu0 %v382
  %v410 = vpop.f32.mrf.mxu0
  %v411 = vadd.f32 %v373, %v410
  %412 = vmatmul.f32.gmra.mxu0 %v385
  %v413 = vpop.f32.mrf.mxu0
  %v414 = vadd.f32 %v373, %v413
  %415 = vdwg.mxu0
  %v416 = vmax.f32 %v405, 0.0
  %v417 = vmax.f32 %v408, 0.0
  %v418 = vmax.f32 %v411, 0.0
  %v419 = vmax.f32 %v414, 0.0
  %v420 = vadd.f32 %v416, %v333
  %v421 = vadd.f32 %v417, %v335
  %v422 = vadd.f32 %v418, %v337
  %v423 = vadd.f32 %v419, %v339
  %v424 = vld [vmem:[%s1] sm:$0x3]
  %v425 = vld [vmem:[%s2 + $0x68] sm:$0xff]
  %v426 = vld [vmem:[%s2 + $0x70] sm:$0xff]
  %429 = vrot.lane.b32.xlu0 %v425, 8
  %v430 = vpop.permute.xlu0 %429
  %431 = vrot.lane.b32.xlu0 %v426, 8
  %v432 = vpop.permute.xlu0 %431
  %v435 = vmul.f32 %v420, %v430
  %v436 = vmul.f32 %v421, %v432
  %v437 = vmul.f32 %v422, %v430
  %v438 = vmul.f32 %v423, %v432
  %443 = vrot.lane.b32.xlu0 %v435, 120
  %v444 = vpop.permute.xlu0 %443
  %445 = vrot.lane.b32.xlu0 %v436, 120
  %v446 = vpop.permute.xlu0 %445
  %447 = vrot.lane.b32.xlu0 %v437, 120
  %v448 = vpop.permute.xlu0 %447
  %449 = vrot.lane.b32.xlu0 %v438, 120
  %v450 = vpop.permute.xlu0 %449
  %v455 = vsel %vm120, %v444, 0.0
  %456 = vadd.xlane.f32.xlu0 %v455
  %v457 = vpop.xlane.xlu0 %456
  %v458 = vsel %vm120, %v446, 0.0
  %459 = vadd.xlane.f32.xlu0 %v458
  %v460 = vpop.xlane.xlu0 %459
  %v461 = vsel %vm120, %v448, 0.0
  %462 = vadd.xlane.f32.xlu0 %v461
  %v463 = vpop.xlane.xlu0 %462
  %v464 = vsel %vm120, %v450, 0.0
  %465 = vadd.xlane.f32.xlu0 %v464
  %v466 = vpop.xlane.xlu0 %465
  %v471 = vlaneseq
  %v472 = vand.u32 %v471, 127
  %v473 = vperm.slane %v457, %v472
  %v474 = vadd.s32 %v472, 4294967288
  %v475 = vperm.slane %v460, %v474
  %vm476 = vcmask 130112
  %v477 = vsel %vm476, %v475, %v473
  %v478 = vperm.slane %v463, %v472
  %v479 = vperm.slane %v466, %v474
  %v480 = vsel %vm476, %v479, %v478
  %vm481 = vcmask 1041409
  %v482 = vsel %vm481, %v480, %v477
  %vm484 = vcmask 123904
  %v485 = vsel %vm484, %v482, 0.0
  %486 = vadd.xlane.f32.xlu0 %v485
  %v487 = vpop.xlane.xlu0 %486
  %v488 = vld [vmem:[%s2 + $0x78] sm:$0x1]
  %v489 = vperm.slane %v488, 0
  %v490 = vmul.f32 %v424, %v489
  %v491 = vsel %vm484, %v490, 0.0
  %492 = vadd.xlane.f32.xlu0 %v491
  %v493 = vpop.xlane.xlu0 %492
  %v494 = vadd.f32 %v487, %v493
  %v495 = vld [vmem:[%s2 + $0x80] sm:$0x1]
  %v496 = vperm.slane %v495, 0
  %v497 = vadd.f32 %v494, %v496
  %v498 = vxor.u32 %v497, 2147483648
  %v499 = vmul.f32 %v498, 1.442695
  %v500 = vpow.pop %v499
  %v501 = vadd.f32 %v500, 1.0
  %v502 = vrcp.pop %v501
  %v503 = vmul.f32 %v501, %v502
  %v504 = vsub.f32 1.0, %v503
  %v505 = vmul.f32 %v502, %v504
  %v506 = vadd.f32 %v502, %v505
  %vm507 = vweird.f32 %v501
  %vm508 = vweird.f32 %v502
  %vm509 = vmor %vm507, %vm508
  %v510 = vsel %vm509, %v502, %v506
  %v511 = vand.u32 2147483647, %v501
  %vm512 = vcmp.eq.f32.partialorder %v511, 8.507059e+37
  %v513 = vand.u32 %v501, 2147483648
  %v514 = vor.u32 1.1754944e-38, %v513
  %v515 = vsel %vm512, %v514, %v510
  %v516 = vmul.f32 1.0, %v515
  %521 = vrot.lane.b32.xlu0 %v420, 120
  %v522 = vpop.permute.xlu0 %521
  %523 = vrot.lane.b32.xlu0 %v421, 120
  %v524 = vpop.permute.xlu0 %523
  %525 = vrot.lane.b32.xlu0 %v422, 120
  %v526 = vpop.permute.xlu0 %525
  %527 = vrot.lane.b32.xlu0 %v423, 120
  %v528 = vpop.permute.xlu0 %527
  %v533 = vrot.slane %v522, 7
  %v534 = vrot.slane %v524, 7
  %v535 = vrot.slane %v526, 7
  %v536 = vrot.slane %v528, 7
  %v537 = vsel %vm188, %v535, %v536
  %v538 = vsel %vm188, %v534, %v535
  %v539 = vsel %vm188, %v533, %v534
  %v540 = vsel %vm188, %v536, %v533
  %v541 = vmul.f32 %v540, %v75
  %v542 = vmul.f32 %v539, %v76
  %v543 = vmul.f32 %v538, %v77
  %v544 = vmul.f32 %v537, %v78
  %v545 = vrot.slane %v522, 1
  %v546 = vrot.slane %v524, 1
  %v547 = vrot.slane %v526, 1
  %v548 = vrot.slane %v528, 1
  %v549 = vsel %vm201, %v547, %v548
  %v550 = vsel %vm201, %v546, %v547
  %v551 = vsel %vm201, %v545, %v546
  %v552 = vsel %vm201, %v548, %v545
  %v553 = vmul.f32 %v551, %v87
  %v554 = vmul.f32 %v550, %v88
  %v555 = vmul.f32 %v549, %v89
  %v556 = vmul.f32 %v552, %v90
  %561 = vrot.lane.b32.xlu0 %v553, 16
  %v562 = vpop.permute.xlu0 %561
  %563 = vrot.lane.b32.xlu0 %v554, 16
  %v564 = vpop.permute.xlu0 %563
  %565 = vrot.lane.b32.xlu0 %v555, 16
  %v566 = vpop.permute.xlu0 %565
  %567 = vrot.lane.b32.xlu0 %v556, 16
  %v568 = vpop.permute.xlu0 %567
  %v573 = vsel %vm120, %v541, %v420
  %v574 = vsel %vm120, %v542, %v421
  %v575 = vsel %vm120, %v543, %v422
  %v576 = vsel %vm120, %v544, %v423
  %v577 = vsel %vm364, %v573, %v562
  %v578 = vsel %vm364, %v574, %v564
  %v579 = vsel %vm364, %v575, %v566
  %v580 = vsel %vm364, %v576, %v568
  %v581 = vld [vmem:[%s2 + $0x48] sm:$0xff]
  %v582 = vld [vmem:[%s2 + $0x50] sm:$0xff]
  %v583 = vld [vmem:[%s2 + $0x58] sm:$0xff]
  %v584 = vld [vmem:[%s2 + $0x60] sm:$0x1]
  %v585 = vperm.slane %v584, 0
  %v587 = vsel %vm374, %v577, 0
  %v590 = vsel %vm374, %v578, 0
  %v593 = vsel %vm374, %v579, 0
  %v596 = vsel %vm374, %v580, 0
  %598 = vmatpush.msra.mxu0 0.0
  %599 = vmatpush.msra.mxu0 0.0
  %600 = vmatpush.msra.mxu0 0.0
  %601 = vmatpush.msra.mxu0 0.0
  %602 = vmatpush.msra.mxu0 0.0
  %603 = vmatpush.msra.mxu0 0.0
  %604 = vmatpush.msra.mxu0 0.0
  %605 = vmatpush.msra.mxu0 0.0
  %606 = vmatpush.msra.mxu0 0.0
  %607 = vmatpush.msra.mxu0 0.0
  %608 = vmatpush.msra.mxu0 0.0
  %609 = vmatpush.msra.mxu0 0.0
  %610 = vmatpush.msra.mxu0 0.0
  %611 = vmatpush.msra.mxu0 %v583
  %612 = vmatpush.msra.mxu0 %v582
  %613 = vmatpush.msra.mxu0 %v581
  %614 = vmatmul.f32.gmra.mxu0 %v587
  %v615 = vpop.f32.mrf.mxu0
  %v616 = vadd.f32 %v585, %v615
  %617 = vmatmul.f32.gmra.mxu0 %v590
  %v618 = vpop.f32.mrf.mxu0
  %v619 = vadd.f32 %v585, %v618
  %620 = vmatmul.f32.gmra.mxu0 %v593
  %v621 = vpop.f32.mrf.mxu0
  %v622 = vadd.f32 %v585, %v621
  %623 = vmatmul.f32.gmra.mxu0 %v596
  %v624 = vpop.f32.mrf.mxu0
  %v625 = vadd.f32 %v585, %v624
  %626 = vdwg.mxu0
  %v627 = vmax.f32 %v616, 0.0
  %v628 = vmax.f32 %v619, 0.0
  %v629 = vmax.f32 %v622, 0.0
  %v630 = vmax.f32 %v625, 0.0
  %635 = vrot.lane.b32.xlu0 %v627, 8
  %v636 = vpop.permute.xlu0 %635
  %637 = vrot.lane.b32.xlu0 %v628, 8
  %v638 = vpop.permute.xlu0 %637
  %639 = vrot.lane.b32.xlu0 %v629, 8
  %v640 = vpop.permute.xlu0 %639
  %641 = vrot.lane.b32.xlu0 %v630, 8
  %v642 = vpop.permute.xlu0 %641
  %v647 = vsel %vm120, %v416, %v636
  %v648 = vsel %vm120, %v417, %v638
  %v649 = vsel %vm120, %v418, %v640
  %v650 = vsel %vm120, %v419, %v642
  %651 = vst.msk [vmem:[#allocation2] sm:$0xff] %vm364, %v647
  %652 = vst.msk [vmem:[#allocation2 + $0x8] sm:$0xff] %vm364, %v648
  %653 = vst.msk [vmem:[#allocation2 + $0x10] sm:$0xff] %vm364, %v649
  %654 = vst.msk [vmem:[#allocation2 + $0x18] sm:$0xff] %vm364, %v650
  %v655 = vld [vmem:[#allocation2] ss:$16 sm:$0x3]
  %s656 = scalar_lea.vmem [#allocation2], 1
  %v657 = vld [vmem:[%s656] ss:$16 sm:$0x3]
  %s658 = scalar_lea.vmem [#allocation2], 2
  %v659 = vld [vmem:[%s658] ss:$16 sm:$0x3]
  %s660 = scalar_lea.vmem [#allocation2], 3
  %v661 = vld [vmem:[%s660] ss:$16 sm:$0x3]
  %s662 = scalar_lea.vmem [#allocation2], 4
  %v663 = vld [vmem:[%s662] ss:$16 sm:$0x3]
  %s664 = scalar_lea.vmem [#allocation2], 5
  %v665 = vld [vmem:[%s664] ss:$16 sm:$0x3]
  %s666 = scalar_lea.vmem [#allocation2], 6
  %v667 = vld [vmem:[%s666] ss:$16 sm:$0x3]
  %s668 = scalar_lea.vmem [#allocation2], 7
  %v669 = vld [vmem:[%s668] ss:$16 sm:$0x3]
  %s670 = scalar_lea.vmem [#allocation2], 8
  %v671 = vld [vmem:[%s670] ss:$16 sm:$0x3]
  %s672 = scalar_lea.vmem [#allocation2], 9
  %v673 = vld [vmem:[%s672] ss:$16 sm:$0x3]
  %s674 = scalar_lea.vmem [#allocation2], 10
  %v675 = vld [vmem:[%s674] ss:$16 sm:$0x3]
  %s676 = scalar_lea.vmem [#allocation2], 11
  %v677 = vld [vmem:[%s676] ss:$16 sm:$0x3]
  %s678 = scalar_lea.vmem [#allocation2], 12
  %v679 = vld [vmem:[%s678] ss:$16 sm:$0x3]
  %s680 = scalar_lea.vmem [#allocation2], 13
  %v681 = vld [vmem:[%s680] ss:$16 sm:$0x3]
  %s682 = scalar_lea.vmem [#allocation2], 14
  %v683 = vld [vmem:[%s682] ss:$16 sm:$0x3]
  %s684 = scalar_lea.vmem [#allocation2], 15
  %v685 = vld [vmem:[%s684] ss:$16 sm:$0x3]
  %687 = vrot.lane.b32.xlu0 %v657, 16
  %v688 = vpop.permute.xlu0 %687
  %691 = vrot.lane.b32.xlu0 %v659, 32
  %v692 = vpop.permute.xlu0 %691
  %695 = vrot.lane.b32.xlu0 %v661, 48
  %v696 = vpop.permute.xlu0 %695
  %699 = vrot.lane.b32.xlu0 %v663, 64
  %v700 = vpop.permute.xlu0 %699
  %703 = vrot.lane.b32.xlu0 %v665, 80
  %v704 = vpop.permute.xlu0 %703
  %707 = vrot.lane.b32.xlu0 %v667, 96
  %v708 = vpop.permute.xlu0 %707
  %711 = vrot.lane.b32.xlu0 %v669, 112
  %v712 = vpop.permute.xlu0 %711
  %715 = vrot.lane.b32.xlu0 %v673, 16
  %v716 = vpop.permute.xlu0 %715
  %719 = vrot.lane.b32.xlu0 %v675, 32
  %v720 = vpop.permute.xlu0 %719
  %723 = vrot.lane.b32.xlu0 %v677, 48
  %v724 = vpop.permute.xlu0 %723
  %727 = vrot.lane.b32.xlu0 %v679, 64
  %v728 = vpop.permute.xlu0 %727
  %731 = vrot.lane.b32.xlu0 %v681, 80
  %v732 = vpop.permute.xlu0 %731
  %735 = vrot.lane.b32.xlu0 %v683, 96
  %v736 = vpop.permute.xlu0 %735
  %739 = vrot.lane.b32.xlu0 %v685, 112
  %v740 = vpop.permute.xlu0 %739
  %v742 = vsel %vm364, %v655, %v688
  %vm743 = vcmask 261120
  %v744 = vsel %vm743, %v742, %v692
  %vm745 = vcmask 392192
  %v746 = vsel %vm745, %v744, %v696
  %vm747 = vcmask 523264
  %v748 = vsel %vm747, %v746, %v700
  %vm749 = vcmask 654336
  %v750 = vsel %vm749, %v748, %v704
  %vm751 = vcmask 785408
  %v752 = vsel %vm751, %v750, %v708
  %vm753 = vcmask 916480
  %v754 = vsel %vm753, %v752, %v712
  %v755 = vsel %vm364, %v671, %v716
  %v756 = vsel %vm743, %v755, %v720
  %v757 = vsel %vm745, %v756, %v724
  %v758 = vsel %vm747, %v757, %v728
  %v759 = vsel %vm749, %v758, %v732
  %v760 = vsel %vm751, %v759, %v736
  %v761 = vsel %vm753, %v760, %v740
  %v762 = vld [vmem:[%s2 + $0x88] sm:$0xff]
  %v763 = vld [vmem:[%s2 + $0x90] sm:$0xff]
  %v764 = vld [vmem:[%s2 + $0x98] sm:$0xff]
  %v765 = vld [vmem:[%s2 + $0xa0] sm:$0xff]
  %v766 = vld [vmem:[%s2 + $0xa8] sm:$0xff]
  %v767 = vld [vmem:[%s2 + $0xb0] sm:$0xff]
  %v768 = vld [vmem:[%s2 + $0xb8] sm:$0xff]
  %v769 = vld [vmem:[%s2 + $0xc0] sm:$0xff]
  %v770 = vld [vmem:[%s2 + $0xc8] sm:$0xff]
  %v771 = vld [vmem:[%s2 + $0xd0] sm:$0xff]
  %v772 = vld [vmem:[%s2 + $0xd8] sm:$0xff]
  %v773 = vld [vmem:[%s2 + $0xe0] sm:$0xff]
  %v774 = vld [vmem:[%s2 + $0xe8] sm:$0xff]
  %v775 = vld [vmem:[%s2 + $0xf0] sm:$0xff]
  %v776 = vld [vmem:[%s2 + $0xf8] sm:$0xff]
  %v777 = vld [vmem:[%s2 + $0x100] sm:$0xff]
  %v778 = vld [vmem:[%s2 + $0x108] sm:$0xff]
  %v779 = vld [vmem:[%s2 + $0x110] sm:$0xff]
  %v780 = vld [vmem:[%s2 + $0x118] sm:$0xff]
  %v781 = vld [vmem:[%s2 + $0x120] sm:$0xff]
  %v782 = vld [vmem:[%s2 + $0x128] sm:$0xff]
  %v783 = vld [vmem:[%s2 + $0x130] sm:$0xff]
  %v784 = vld [vmem:[%s2 + $0x138] sm:$0xff]
  %v785 = vld [vmem:[%s2 + $0x140] sm:$0xff]
  %v786 = vld [vmem:[%s2 + $0x148] sm:$0xff]
  %v787 = vld [vmem:[%s2 + $0x150] sm:$0xff]
  %v788 = vld [vmem:[%s2 + $0x158] sm:$0xff]
  %v789 = vld [vmem:[%s2 + $0x160] sm:$0xff]
  %v790 = vld [vmem:[%s2 + $0x168] sm:$0xff]
  %v791 = vld [vmem:[%s2 + $0x170] sm:$0xff]
  %v792 = vld [vmem:[%s2 + $0x178] sm:$0xff]
  %v793 = vld [vmem:[%s2 + $0x180] sm:$0xff]
  %v794 = vld [vmem:[%s2 + $0x188] sm:$0xff]
  %v795 = vld [vmem:[%s2 + $0x190] sm:$0xff]
  %v796 = vld [vmem:[%s2 + $0x198] sm:$0x1]
  %v797 = vperm.slane %v796, 0
  %v799 = vsel %vm364, %v424, 0
  %801 = vmatpush.msra.mxu0 %v777
  %802 = vmatpush.msra.mxu0 %v776
  %803 = vmatpush.msra.mxu0 %v775
  %804 = vmatpush.msra.mxu0 %v774
  %805 = vmatpush.msra.mxu0 %v773
  %806 = vmatpush.msra.mxu0 %v772
  %807 = vmatpush.msra.mxu0 %v771
  %808 = vmatpush.msra.mxu0 %v770
  %809 = vmatpush.msra.mxu0 %v769
  %810 = vmatpush.msra.mxu0 %v768
  %811 = vmatpush.msra.mxu0 %v767
  %812 = vmatpush.msra.mxu0 %v766
  %813 = vmatpush.msra.mxu0 %v765
  %814 = vmatpush.msra.mxu0 %v764
  %815 = vmatpush.msra.mxu0 %v763
  %816 = vmatpush.msra.mxu0 %v762
  %817 = vmatmul.f32.gmra.mxu0 %v754
  %v818 = vpop.f32.mrf.mxu0
  %v819 = vadd.f32 %v797, %v818
  %820 = vdwg.mxu0
  %821 = vmatpush.msra.mxu0 %v793
  %822 = vmatpush.msra.mxu0 %v792
  %823 = vmatpush.msra.mxu0 %v791
  %824 = vmatpush.msra.mxu0 %v790
  %825 = vmatpush.msra.mxu0 %v789
  %826 = vmatpush.msra.mxu0 %v788
  %827 = vmatpush.msra.mxu0 %v787
  %828 = vmatpush.msra.mxu0 %v786
  %829 = vmatpush.msra.mxu0 %v785
  %830 = vmatpush.msra.mxu0 %v784
  %831 = vmatpush.msra.mxu0 %v783
  %832 = vmatpush.msra.mxu0 %v782
  %833 = vmatpush.msra.mxu0 %v781
  %834 = vmatpush.msra.mxu0 %v780
  %835 = vmatpush.msra.mxu0 %v779
  %836 = vmatpush.msra.mxu0 %v778
  %837 = vmatmul.f32.gmra.mxu0 %v761
  %v838 = vpop.f32.mrf.mxu0
  %v839 = vadd.f32 %v819, %v838
  %840 = vdwg.mxu0
  %841 = vmatpush.msra.mxu0 0.0
  %842 = vmatpush.msra.mxu0 0.0
  %843 = vmatpush.msra.mxu0 0.0
  %844 = vmatpush.msra.mxu0 0.0
  %845 = vmatpush.msra.mxu0 0.0
  %846 = vmatpush.msra.mxu0 0.0
  %847 = vmatpush.msra.mxu0 0.0
  %848 = vmatpush.msra.mxu0 0.0
  %849 = vmatpush.msra.mxu0 0.0
  %850 = vmatpush.msra.mxu0 0.0
  %851 = vmatpush.msra.mxu0 0.0
  %852 = vmatpush.msra.mxu0 0.0
  %853 = vmatpush.msra.mxu0 0.0
  %854 = vmatpush.msra.mxu0 0.0
  %855 = vmatpush.msra.mxu0 %v795
  %856 = vmatpush.msra.mxu0 %v794
  %857 = vmatmul.f32.gmra.mxu0 %v799
  %v858 = vpop.f32.mrf.mxu0
  %v859 = vadd.f32 %v839, %v858
  %860 = vdwg.mxu0
  %v861 = vmax.f32 %v859, 0.0
  %v862 = vld [vmem:[%s2 + $0x1a0] sm:$0xff]
  %v863 = vld [vmem:[%s2 + $0x1a8] sm:$0xff]
  %v864 = vld [vmem:[%s2 + $0x1b0] sm:$0xff]
  %v865 = vld [vmem:[%s2 + $0x1b8] sm:$0xff]
  %v866 = vld [vmem:[%s2 + $0x1c0] sm:$0x1]
  %v867 = vperm.slane %v866, 0
  %v869 = vsel %vm743, %v861, 0
  %871 = vmatpush.msra.mxu0 0.0
  %872 = vmatpush.msra.mxu0 0.0
  %873 = vmatpush.msra.mxu0 0.0
  %874 = vmatpush.msra.mxu0 0.0
  %875 = vmatpush.msra.mxu0 0.0
  %876 = vmatpush.msra.mxu0 0.0
  %877 = vmatpush.msra.mxu0 0.0
  %878 = vmatpush.msra.mxu0 0.0
  %879 = vmatpush.msra.mxu0 0.0
  %880 = vmatpush.msra.mxu0 0.0
  %881 = vmatpush.msra.mxu0 0.0
  %882 = vmatpush.msra.mxu0 0.0
  %883 = vmatpush.msra.mxu0 %v865
  %884 = vmatpush.msra.mxu0 %v864
  %885 = vmatpush.msra.mxu0 %v863
  %886 = vmatpush.msra.mxu0 %v862
  %887 = vmatmul.f32.gmra.mxu0 %v869
  %v888 = vpop.f32.mrf.mxu0
  %v889 = vadd.f32 %v867, %v888
  %890 = vdwg.mxu0
  %v891 = vmax.f32 %v889, 0.0
  %v892 = vld [vmem:[%s2 + $0x1c8] sm:$0x1]
  %v893 = vperm.slane %v892, 0
  %v894 = vmul.f32 %v891, %v893
  %vm895 = vcmask 254976
  %v896 = vsel %vm895, %v894, 0.0
  %897 = vadd.xlane.f32.xlu0 %v896
  %v898 = vpop.xlane.xlu0 %897
  %v899 = vld [vmem:[%s2 + $0x1d0] sm:$0x1]
  %v900 = vperm.slane %v899, 0
  %v901 = vadd.f32 %v898, %v900
  %902 = vst [vmem:[%s3] sm:$0xff] 0.0
  %904 = vrot.lane.b32.xlu0 %v516, 1
  %v905 = vpop.permute.xlu0 %904
  %vm907 = vcmask 7168
  %v908 = vsel %vm907, %v901, %v905
  %vm909 = vcmask 15360
  %v910 = vsel %vm909, %v908, 0.0
  %911 = vst [vmem:[%s3] sm:$0x3] %v910
  // Predicated region
  $region14: #{forward.1} parent=0 // pred_check
    _
  $region15: #{forward.1} parent=0 // pred_check_branch
    %913 = sbr.rel (0) target = $region17
  $region16: #{forward.1} parent=0 // pred_region
    _
  $region17: #{forward.1} parent=0 // pred_fallthru
    _
  // Predicated region
  $region18: #{forward.1} parent=0 // pred_check
    _
  $region19: #{forward.1} parent=0 // pred_check_branch
    %915 = sbr.rel (0) target = $region21
  $region20: #{forward.1} parent=0 // pred_region
    _
  $region21: #{forward.1} parent=0 // pred_fallthru
    _

</llo_original>
